<compile_context>
chip_gen: v6e
topology: v6e:2x2x1
jax: 0.10.0
libtpu: 0.0.40
codegen_flags: <defaults>
</compile_context>

<pallas_src>
import jax
import jax.numpy as jnp
from jax.experimental import pallas as pl
from jax.experimental.pallas import tpu as pltpu

_LANE = 128


def _capture_kernel(x_ref, fmap_ref):
    """Lane-dense VMEM pass-through for one tile (the hook's capture)."""
    fmap_ref[...] = x_ref[...]


def _sublane_rows(dtype):
    """Rows per native sublane tile: 8 for f32, 16 for bf16, 32 for int8/fp8."""
    itemsize = jnp.dtype(dtype).itemsize
    return max(8, 32 // max(1, itemsize))


def _budgets():
    """(tile_budget_bytes, vmem_limit_bytes_or_None) per TPU generation.

    Double-buffered in+out => peak ~4 x tile, which must stay within the
    scoped-VMEM limit (16 MiB default v5e, 32 MiB v6e/v7x; v7x physical 64 MiB).
    """
    try:
        kind = jax.devices()[0].device_kind.lower()
    except Exception:
        kind = ""
    if "v6" in kind or "v7" in kind:
        # 4 x 6 MiB = 24 MiB; raise the scoped limit for headroom (< 64 MiB
        # physical on v7x, < 128 MiB on v6e).
        return 6 * 1024 * 1024, 48 * 1024 * 1024
    # v5e and unknown chips: stay under the 16 MiB scoped default.
    return 2 * 1024 * 1024, None


def _lane_dense_layout(total, row_unit):
    """Pick (rows, cols, padded_total): cols a multiple of 128 (lane-dense),
    rows a multiple of the dtype's sublane packing.  Pads `total` up if needed
    (cheap XLA pad/slice in the wrapper) instead of a degenerate (1, total)."""
    cols = _LANE
    for c in (2048, 1024, 512, 256, 128):
        if total >= c * row_unit:
            cols = c
            break
    unit = cols * row_unit
    padded_total = pl.cdiv(total, unit) * unit
    rows = padded_total // cols
    return rows, cols, padded_total


def _pick_block_rows(rows, cols, itemsize, row_unit, target_bytes):
    """Largest sublane-aligned row block <= target_bytes per tile.

    Caps at rows//2 (aligned) when possible so the grid has >=2 tiles and the
    copy can be sharded across v7x's two TensorCores (near-neutral on 1-TC
    chips).  The grid uses cdiv, so block_rows need not divide rows.
    """
    row_bytes = cols * itemsize
    max_rows = max(row_unit, (target_bytes // row_bytes) // row_unit * row_unit)
    block_rows = min(rows, max_rows)
    if block_rows >= rows and rows >= 2 * row_unit:
        block_rows = max(row_unit, (rows // 2) // row_unit * row_unit)
    return block_rows


def _materialize_feature_map(x):
    """Explicit HBM copy of `x` (a physically distinct captured feature map).

    Presents a lane-dense 2-D slab to the kernel, streamed through VMEM with
    BlockSpec double-buffering.
    """
    orig_shape = x.shape
    dtype = x.dtype
    itemsize = jnp.dtype(dtype).itemsize
    total = x.size
    row_unit = _sublane_rows(dtype)

    rows, cols, padded_total = _lane_dense_layout(total, row_unit)
    flat = x.reshape(total)
    if padded_total != total:
        flat = jnp.pad(flat, (0, padded_total - total))
    x2 = flat.reshape(rows, cols)

    tile_budget, vmem_limit = _budgets()
    block_rows = _pick_block_rows(rows, cols, itemsize, row_unit, tile_budget)
    grid = (pl.cdiv(rows, block_rows),)

    fmap2 = pl.pallas_call(
        _capture_kernel,
        out_shape=jax.ShapeDtypeStruct((rows, cols), dtype),
        grid=grid,
        in_specs=[pl.BlockSpec((block_rows, cols), lambda i: (i, 0))],
        out_specs=pl.BlockSpec((block_rows, cols), lambda i: (i, 0)),
        compiler_params=pltpu.CompilerParams(
            dimension_semantics=("parallel",),
            vmem_limit_bytes=vmem_limit,
        ),
        cost_estimate=pl.CostEstimate(
            flops=0,
            transcendentals=0,
            bytes_accessed=2 * padded_total * itemsize,
        ),
    )(x2)

    fmap_flat = fmap2.reshape(padded_total)
    if padded_total != total:
        fmap_flat = fmap_flat[:total]
    return fmap_flat.reshape(orig_shape)


def teacher_base_forward(x, *, materialize_feature_maps=False):
    """Pallas equivalent of TeacherBase.forward.

    Returns (output, feature_maps).  The base class defines no layers, so the
    forward output is the input itself.  The captured feature map defaults to
    a zero-cost alias of `x` (no kernel, no HBM traffic); set
    `materialize_feature_maps=True` only if a downstream consumer requires a
    physically distinct HBM buffer, in which case the tiled Pallas copy runs.
    """
    out = x
    if materialize_feature_maps:
        feature_maps = {"identity": _materialize_feature_map(x)}
    else:
        feature_maps = {"identity": x}  # zero-cost alias (review item #1)
    return out, feature_maps


if __name__ == "__main__":
    key = jax.random.PRNGKey(0)
    # Small NCHW input consistent with a conv-style teacher network.
    x = jax.random.normal(key, (2, 4, 16, 16), dtype=jnp.float32)

    # Default (recommended) path: zero-cost aliasing, no kernel launched.
    out, fmaps = teacher_base_forward(x)
    assert out is x and fmaps["identity"] is x

    # Materializing path: exercises the Pallas copy kernel once.
    out_m, fmaps_m = teacher_base_forward(x, materialize_feature_maps=True)
    out_m = jax.block_until_ready(out_m)
    fmap = jax.block_until_ready(fmaps_m["identity"])
    assert out_m.shape == x.shape and fmap.shape == x.shape
    assert bool(jnp.array_equal(out_m, x)) and bool(jnp.array_equal(fmap, x))

    # Non-128-divisible, sub-32-bit input: exercises the padding + bf16
    # sublane-packing (16-row) path that replaced the old (1, total) fallback.
    y = jax.random.normal(jax.random.PRNGKey(1), (3, 5, 7), dtype=jnp.bfloat16)
    _, fm_y = teacher_base_forward(y, materialize_feature_maps=True)
    fm_y_id = jax.block_until_ready(fm_y["identity"])
    assert fm_y_id.shape == y.shape and bool(jnp.array_equal(fm_y_id, y))

    print("KERNEL_OK")
</pallas_src>

<mosaic_0001>
module attributes {stable_mosaic.version = 11 : i64} {
  func.func @_capture_kernel(%arg0: i32, %arg1: memref<8x256xf32, #tpu.memory_space<vmem>>, %arg2: memref<8x256xf32, #tpu.memory_space<vmem>>) attributes {dimension_semantics = [#tpu.dimension_semantics<parallel>], iteration_bounds = array<i64: 1>, scalar_prefetch = 0 : i64, scratch_operands = 0 : i64, tpu.core_type = #tpu.core_type<tc>, window_params = [{transform_indices = @transform_0, window_bounds = array<i64: 8, 256>}, {transform_indices = @transform_1, window_bounds = array<i64: 8, 256>}]} {
    %c0 = arith.constant 0 : index
    %c0_0 = arith.constant 0 : index
    %0 = vector.load %arg1[%c0, %c0_0] : memref<8x256xf32, #tpu.memory_space<vmem>>, vector<8x256xf32>
    %c0_1 = arith.constant 0 : index
    %c0_2 = arith.constant 0 : index
    %1 = vector.load %arg2[%c0_1, %c0_2] : memref<8x256xf32, #tpu.memory_space<vmem>>, vector<8x256xf32>
    tpu.vector_store %arg2[%c0_1, %c0_2], %0 {strides = array<i32>} : memref<8x256xf32, #tpu.memory_space<vmem>>, vector<8x256xf32>,
    return
  }
  func.func @transform_0(%arg0: i32) -> (i32, i32) {
    %c0_i32 = arith.constant 0 : i32
    %c0_i32_0 = arith.constant 0 : i32
    return %arg0, %c0_i32 : i32, i32
  }
  func.func @transform_1(%arg0: i32) -> (i32, i32) {
    %c0_i32 = arith.constant 0 : i32
    %c0_i32_0 = arith.constant 0 : i32
    return %arg0, %c0_i32 : i32, i32
  }
}

</mosaic_0001>

<llo_original>
// kernel: tpu_custom_call.1
$region0: #{tpu_custom_call.1}
  #allocation0 [shape = 'u32[]', space=smem, size = 0x4, offset = 0x4, fixed_abs, tag = 'smem constant byte address 0x4 - core index']
  #allocation1 [shape = 'u32[144,128]{1,0:T(1,128)}', space=vmem, size = 0x12000, scoped, tag = 'internal scratch']
  %s0 = inlined_call_operand.hbm [shape: f32[8,256], index: 0, kind: input, shape index: {}]
  %s1 = inlined_call_operand.hbm [shape: f32[8,256], index: 1, kind: output, shape index: {}]
  %s2 = sld [smem:[#allocation0]]
  $region18: #{tpu_custom_call.1} parent=0
    _
  %s4 = ssub.s32 1, %s2
  %s5 = scalar_select 0, %s4, %s2
  $region1: #{tpu_custom_call.1} parent=0
    #allocation2 [shape = 'u8[8192]{0}', space=vmem, size = 0x2000, scoped, tag = 'input window, operand 0, single buffered']
    #allocation3 [shape = 's32[1]{0}', space=sflag, size = 0x4, scoped, tag = 'scoped memory for tpu_custom_call.1']
    #allocation4 [shape = 's32[1]{0}', space=sflag, size = 0x4, scoped, tag = 'scoped memory for tpu_custom_call.1']
    #allocation5 [shape = 'u8[8192]{0}', space=vmem, size = 0x2000, scoped, tag = 'output window, operand 0, single buffered']
    %6 = vsyncpa [#allocation3], 0
    %7 = vsyncpa [#allocation4], 0
    // Predicated region
    $region2: #{tpu_custom_call.1} parent=1 // pred_check
      _
    $region3: #{tpu_custom_call.1} parent=1 // pred_check_branch
      %9 = sbr.rel (0) target = $region5
    $region4: #{tpu_custom_call.1} parent=1 // pred_region
      %s11 = ssub.s32 256, 256
      %12 = vsyncadd [#allocation3], %s11
      %s14 = sshll.u32 [#allocation2], 4
      %s15 = int_to_ptr.vmem [resolvable:$true] %s14
      %17 = dma.hbm_to_vmem [thread:$0]  %s0, 256, %s15, [#allocation3]
    $region5: #{tpu_custom_call.1} parent=1 // pred_fallthru
      _
    // Predicated region
    $region6: #{tpu_custom_call.1} parent=1 // pred_check
      _
    $region7: #{tpu_custom_call.1} parent=1 // pred_check_branch
      %19 = sbr.rel (0) target = $region9
    $region8: #{tpu_custom_call.1} parent=1 // pred_region
      %20 = dma.done [#allocation3], 256
    $region9: #{tpu_custom_call.1} parent=1 // pred_fallthru
      _
    %v21 = vld [vmem:[#allocation2] sm:$0xff]
    %v22 = vld [vmem:[#allocation2 + $0x8] sm:$0xff]
    %23 = vst [vmem:[#allocation5] sm:$0xff] %v21
    %24 = vst [vmem:[#allocation5 + $0x8] sm:$0xff] %v22
    // Predicated region
    $region10: #{tpu_custom_call.1} parent=1 // pred_check
      _
    $region11: #{tpu_custom_call.1} parent=1 // pred_check_branch
      %26 = sbr.rel (0) target = $region13
    $region12: #{tpu_custom_call.1} parent=1 // pred_region
      %s28 = ssub.s32 256, 256
      %29 = vsyncadd [#allocation4], %s28
      %s31 = sshll.u32 [#allocation5], 4
      %s32 = int_to_ptr.vmem [resolvable:$true] %s31
      %34 = dma.vmem_to_hbm [thread:$0]  %s32, 256, %s1, [#allocation4]
    $region13: #{tpu_custom_call.1} parent=1 // pred_fallthru
      _
    // Predicated region
    $region14: #{tpu_custom_call.1} parent=1 // pred_check
      _
    $region15: #{tpu_custom_call.1} parent=1 // pred_check_branch
      %36 = sbr.rel (0) target = $region17
    $region16: #{tpu_custom_call.1} parent=1 // pred_region
      %37 = dma.done [#allocation4], 256
    $region17: #{tpu_custom_call.1} parent=1 // pred_fallthru
      _
    %38 = vsyncpa [#allocation3], 1
    %39 = vsyncpa [#allocation4], 1

</llo_original>
